<compile_context>
chip_gen: v5e
topology: v5e:2x2
jax: 0.10.0
libtpu: 0.0.40
codegen_flags: <defaults>
</compile_context>

<pallas_src>
import functools

import jax
import jax.numpy as jnp
from jax import lax
from jax.experimental import pallas as pl
from jax.experimental.pallas import tpu as pltpu

_BN_EPS = 1e-5
_MXU_DTYPE = jnp.bfloat16   # matmul operands; accumulation is f32


def _tpu_vmem_limit_bytes():
    # 48 MiB fallback is safe on every generation (v7x physical VMEM = 64 MiB).
    default = 48 * 1024 * 1024
    try:
        cap = getattr(pltpu.get_tpu_info(), "vmem_capacity_bytes", None)
        if not cap:
            return default
        return int(cap) * 3 // 4        # ~48 MiB on v7x, ~96 MiB on v5e/v6e
    except Exception:
        return default


def _bf16_elementwise_supported():
    # v6e / v7x have bf16 VALUs; v5e and older do not.
    try:
        kind = jax.devices()[0].device_kind.lower()
    except Exception:
        return False
    return ("v6" in kind) or ("v7" in kind) or ("trillium" in kind)


_VMEM_LIMIT_BYTES = _tpu_vmem_limit_bytes()
if _bf16_elementwise_supported():
    _ELEM_DTYPE, _ELEM_BYTES = jnp.bfloat16, 2
else:
    _ELEM_DTYPE, _ELEM_BYTES = jnp.float32, 4


# ----------------------------------------------------------------------------
# Plain-JAX grouping glue (mirrors the PyTorch helpers)
# ----------------------------------------------------------------------------
def farthest_point_sampling(xyz, npoint, init_farthest):
    B, N, _ = xyz.shape

    def body(i, state):
        centroids, distance, farthest = state
        centroids = centroids.at[:, i].set(farthest)
        centroid = xyz[jnp.arange(B), farthest][:, None, :]          # (B,1,3)
        dist = jnp.sum((xyz - centroid) ** 2, axis=-1)               # (B,N)
        distance = jnp.minimum(distance, dist)
        farthest = jnp.argmax(distance, axis=-1).astype(jnp.int32)
        return centroids, distance, farthest

    centroids = jnp.zeros((B, npoint), jnp.int32)
    distance = jnp.full((B, N), 1e10, jnp.float32)
    centroids, _, _ = lax.fori_loop(
        0, npoint, body, (centroids, distance, init_farthest.astype(jnp.int32)))
    return centroids


def index_points(points, idx):
    # points: (B, N, C); idx: (B, S) or (B, S, K)
    return jax.vmap(lambda p, i: p[i])(points, idx)


def square_distance(src, dst):
    dist = -2.0 * jnp.matmul(src, jnp.swapaxes(dst, 1, 2))
    dist = dist + jnp.sum(src ** 2, axis=-1, keepdims=True)
    dist = dist + jnp.sum(dst ** 2, axis=-1)[:, None, :]
    return dist


def query_ball_point(radius, nsample, xyz, new_xyz):
    B, N, _ = xyz.shape
    S = new_xyz.shape[1]
    sqrdists = square_distance(new_xyz, xyz)                         # (B,S,N)
    group_idx = jnp.broadcast_to(jnp.arange(N, dtype=jnp.int32), (B, S, N))
    group_idx = jnp.where(sqrdists > radius ** 2, N, group_idx)
    group_idx = jnp.sort(group_idx, axis=-1)[..., :nsample]          # (B,S,K)
    group_first = group_idx[:, :, 0:1]
    group_idx = jnp.where(group_idx == N, group_first, group_idx)
    return group_idx


# ----------------------------------------------------------------------------
# Pallas kernels
# ----------------------------------------------------------------------------
def _stats_kernel(x_ref, w1_ref, sb1_ref, sum_ref, gram_ref, *,
                  rows_per_tile, total_valid_rows, need_mask):
    """Layer-1 matmul + BN1 + ReLU; emit per-tile sum(a1) and Gram(a1)."""
    h1 = jnp.dot(x_ref[...], w1_ref[...],
                 preferred_element_type=jnp.float32)                 # (rows, C1p)
    # Stats path stays f32 for accuracy (it feeds the BN2 fold).
    a1 = jnp.maximum(h1 * sb1_ref[0:1, :] + sb1_ref[1:2, :], 0.0)
    if need_mask:
        # Rows past the real G*K come from group-axis padding; zero them so
        # they do not pollute the layer-2 batch statistics.
        row0 = pl.program_id(0) * rows_per_tile
        rid = row0 + lax.broadcasted_iota(jnp.int32, (rows_per_tile, 1), 0)
        a1 = jnp.where(rid < total_valid_rows, a1, 0.0)
    sum_ref[...] = jnp.sum(a1, axis=0, keepdims=True)                # (1, C1p)
    # Gram over the big rows dim -> MXU, not VALU column reductions.
    gram_ref[...] = jnp.dot(a1.T, a1,
                            preferred_element_type=jnp.float32)      # (C1p, C1p)


def _fwd_kernel(x_ref, w1_ref, w2_ref, sb1_ref, sb2_ref, o_ref, *,
                nsample, elem_dtype):
    """Full pipeline: L1 -> BN1+ReLU -> L2 -> BN2+ReLU -> max-pool over K."""
    h1 = jnp.dot(x_ref[...], w1_ref[...],
                 preferred_element_type=jnp.float32)                 # (rows, C1p)
    s1 = sb1_ref[0:1, :].astype(elem_dtype)
    b1 = sb1_ref[1:2, :].astype(elem_dtype)
    a1 = jnp.maximum(h1.astype(elem_dtype) * s1 + b1, 0)             # BN1 + ReLU

    h2 = jnp.dot(a1.astype(_MXU_DTYPE), w2_ref[...],
                 preferred_element_type=jnp.float32)                 # (rows, C2p)
    s2 = sb2_ref[0:1, :].astype(elem_dtype)
    b2 = sb2_ref[1:2, :].astype(elem_dtype)
    a2 = jnp.maximum(h2.astype(elem_dtype) * s2 + b2, 0)             # BN2 + ReLU

    tg = o_ref.shape[0]
    # F.max_pool2d over the nsample axis (groups are contiguous K-row blocks).
    o_ref[...] = jnp.max(
        a2.reshape(tg, nsample, a2.shape[-1]), axis=1).astype(o_ref.dtype)


def _round_up(x, m):
    return (x + m - 1) // m * m


def _choose_tile_groups(G, K, C1p, C2p, elem_bytes, vmem_limit_bytes, cap=None):
    """VMEM-budget-driven tile size over the group axis.

    Returns (tile_groups, n_tiles, padded_G).
    """
    # Per-row live VMEM of the forward kernel (the larger of the two):
    #   x block : bf16, Cin lane-padded to 128 lanes, double-buffered (~512 B/row)
    #   h1/h2   : f32 matmul results
    #   a1/a2   : elementwise dtype (bf16 on v6e/v7x, f32 on v5e), + pool copy
    #   output  : f32, double-buffered, amortised over K rows
    per_row = (2 * 2 * 128
               + 4 * C1p + elem_bytes * C1p
               + 4 * C2p + 2 * elem_bytes * C2p
               + (2 * 4 * C2p) // max(K, 1))
    const = (2 * 8 * C1p * 2              # w1 bf16 (sublane-padded), 2 buffers
             + 2 * C1p * C2p * 2          # w2 bf16, 2 buffers
             + 2 * C1p * C1p * 4          # Gram output block (stats kernel)
             + 4 * 8 * (C1p + C2p) * 4)   # sb1/sb2 + slack
    budget = (vmem_limit_bytes * 6) // 10
    rows_max = max(K, (budget - const) // per_row)
    tg = max(1, rows_max // K)
    if cap is not None:
        tg = min(tg, cap)
    if tg >= G:
        return G, 1, G                    # single tile: block == full array dims
    # Multi-tile blocks need (8,128)-style alignment; bf16 rows prefer %16.
    tg = max(8, (tg // 8) * 8)
    if (tg * K) % 16 != 0:
        tg = max(16, (tg // 16) * 16)
    gp = _round_up(G, tg)                 # pad G; padded rows masked in stats
    return tg, gp // tg, gp


def sa_mlp_pallas(x, params, *, max_tile_groups=None):
    """x: (G, K, Cin) grouped channels-last points. Returns (G, mlp[-1]) f32."""
    G, K, Cin = x.shape
    C1 = params['w1'].shape[1]
    C2 = params['w2'].shape[1]
    # Lane-dense channel padding (multiples of 128 only; no chasing the 256x256
    # MXU with zero padding). Padded channels carry exact zeros end-to-end.
    C1p = _round_up(C1, 128)
    C2p = _round_up(C2, 128)
    R = G * K

    def pad2(a, rows, cols):
        return jnp.pad(a, ((0, rows - a.shape[0]), (0, cols - a.shape[1])))

    w1f = params['w1']                                   # (Cin, C1) f32
    w2f_pad = pad2(params['w2'], C1p, C2p)               # (C1p, C2p) f32
    w1 = pad2(w1f, Cin, C1p).astype(_MXU_DTYPE)
    w2 = w2f_pad.astype(_MXU_DTYPE)

    # ---- layer-1 BN batch stats analytically from input moments (no phase 0)
    # sum(h1) = sum_rows(x) @ W1 ;  sum(h1^2)[c] = diag(W1^T (X^T X) W1)[c]
    x2d_f32 = x.reshape(R, Cin).astype(jnp.float32)
    sum_x = jnp.sum(x2d_f32, axis=0)                     # (Cin,)
    xtx = jnp.dot(x2d_f32.T, x2d_f32)                    # (Cin, Cin), tiny
    sum_h1 = sum_x @ w1f                                 # (C1,)
    sumsq_h1 = jnp.sum((xtx @ w1f) * w1f, axis=0)        # (C1,)
    mean1 = sum_h1 / R
    var1 = jnp.maximum(sumsq_h1 / R - mean1 * mean1, 0.0)
    scale1 = params['g1'][0] * lax.rsqrt(var1 + _BN_EPS)
    bias1 = params['bt1'][0] - mean1 * scale1
    sb1 = (jnp.zeros((2, C1p), jnp.float32)
           .at[0, :C1].set(scale1).at[1, :C1].set(bias1))

    # ---- tile size / group-axis padding ----------------------------------
    tg, n_tiles, Gp = _choose_tile_groups(
        G, K, C1p, C2p, _ELEM_BYTES, _VMEM_LIMIT_BYTES, cap=max_tile_groups)
    rows = tg * K
    Rp = Gp * K
    x_bf = x.reshape(R, Cin).astype(_MXU_DTYPE)          # bf16 halves HBM traffic
    if Rp > R:
        x_bf = jnp.pad(x_bf, ((0, Rp - R), (0, 0)))

    cparams = pltpu.CompilerParams(
        dimension_semantics=("parallel",),               # megacore-friendly on v7x
        vmem_limit_bytes=_VMEM_LIMIT_BYTES)

    # ---- kernel A: per-tile sum(a1) and Gram(a1) --------------------------
    stats_kernel = functools.partial(
        _stats_kernel, rows_per_tile=rows, total_valid_rows=R,
        need_mask=(Rp > R))
    sum_part, gram_part = pl.pallas_call(
        stats_kernel,
        out_shape=(jax.ShapeDtypeStruct((n_tiles, 1, C1p), jnp.float32),
                   jax.ShapeDtypeStruct((n_tiles, C1p, C1p), jnp.float32)),
        grid=(n_tiles,),
        in_specs=[
            pl.BlockSpec((rows, Cin), lambda g: (g, 0)),
            pl.BlockSpec((Cin, C1p), lambda g: (0, 0)),
            pl.BlockSpec((2, C1p), lambda g: (0, 0)),
        ],
        out_specs=(
            pl.BlockSpec((None, 1, C1p), lambda g: (g, 0, 0)),
            pl.BlockSpec((None, C1p, C1p), lambda g: (g, 0, 0)),
        ),
        compiler_params=cparams,
    )(x_bf, w1, sb1)

    # ---- fold layer-2 BN stats (tiny, plain JAX) ---------------------------
    sum_a1 = jnp.sum(sum_part, axis=0)[0]                # (C1p,)
    gram = jnp.sum(gram_part, axis=0)                    # (C1p, C1p)
    sum_h2 = sum_a1 @ w2f_pad                            # (C2p,)
    sumsq_h2 = jnp.sum((gram @ w2f_pad) * w2f_pad, axis=0)
    mean2 = sum_h2 / R
    var2 = jnp.maximum(sumsq_h2 / R - mean2 * mean2, 0.0)
    g2 = jnp.pad(params['g2'][0], (0, C2p - C2))
    bt2 = jnp.pad(params['bt2'][0], (0, C2p - C2))
    scale2 = g2 * lax.rsqrt(var2 + _BN_EPS)
    bias2 = bt2 - mean2 * scale2
    sb2 = jnp.stack([scale2, bias2], axis=0)             # (2, C2p)

    # ---- kernel B: full pipeline + max-pool --------------------------------
    fwd_kernel = functools.partial(_fwd_kernel, nsample=K, elem_dtype=_ELEM_DTYPE)
    out = pl.pallas_call(
        fwd_kernel,
        out_shape=jax.ShapeDtypeStruct((Gp, C2p), jnp.float32),
        grid=(n_tiles,),
        in_specs=[
            pl.BlockSpec((rows, Cin), lambda g: (g, 0)),
            pl.BlockSpec((Cin, C1p), lambda g: (0, 0)),
            pl.BlockSpec((C1p, C2p), lambda g: (0, 0)),
            pl.BlockSpec((2, C1p), lambda g: (0, 0)),
            pl.BlockSpec((2, C2p), lambda g: (0, 0)),
        ],
        out_specs=pl.BlockSpec((tg, C2p), lambda g: (g, 0)),
        compiler_params=cparams,
    )(x_bf, w1, w2, sb1, sb2)
    return out[:G, :C2]


# ----------------------------------------------------------------------------
# Module wrapper
# ----------------------------------------------------------------------------
def init_params(key, in_channel, mlp):
    assert len(mlp) == 2, "this synthetic kernel is specialized to a 2-layer MLP"
    # Conv2d biases are omitted: under training-mode BatchNorm they are
    # exactly cancelled by the mean subtraction (mathematical no-op).
    keys = jax.random.split(key, 6)
    c0, c1, c2 = in_channel, mlp[0], mlp[1]
    return {
        'w1': 0.1 * jax.random.normal(keys[0], (c0, c1), jnp.float32),
        'g1': 1.0 + 0.1 * jax.random.normal(keys[1], (1, c1), jnp.float32),
        'bt1': 0.1 * jax.random.normal(keys[2], (1, c1), jnp.float32),
        'w2': 0.1 * jax.random.normal(keys[3], (c1, c2), jnp.float32),
        'g2': 1.0 + 0.1 * jax.random.normal(keys[4], (1, c2), jnp.float32),
        'bt2': 0.1 * jax.random.normal(keys[5], (1, c2), jnp.float32),
    }


@functools.partial(jax.jit, static_argnames=('npoint', 'radius', 'nsample',
                                             'group_all', 'max_tile_groups'))
def pointnet_set_abstraction(xyz, points, params, fps_init, *,
                             npoint, radius, nsample, group_all,
                             max_tile_groups=None):
    B, N, _ = xyz.shape
    if group_all or npoint is None:
        new_xyz = jnp.zeros((B, 1, 3), jnp.float32)
        grouped_xyz = xyz.reshape(B, 1, N, 3)
        if points is not None:
            new_points = jnp.concatenate(
                [grouped_xyz, points.reshape(B, 1, N, -1)], axis=-1)
        else:
            new_points = grouped_xyz
        S, K = 1, N
    else:
        idx_fps = farthest_point_sampling(xyz, npoint, fps_init)      # (B,S)
        new_xyz = index_points(xyz, idx_fps)                          # (B,S,3)
        idx_ball = query_ball_point(radius, nsample, xyz, new_xyz)    # (B,S,K)
        grouped_xyz = index_points(xyz, idx_ball) - new_xyz[:, :, None, :]
        if points is not None:
            grouped_points = index_points(points, idx_ball)
            new_points = jnp.concatenate([grouped_xyz, grouped_points], axis=-1)
        else:
            new_points = grouped_xyz
        S, K = npoint, nsample

    # new_points: (B, S, K, C) -> kernel layout (G=B*S, K, C) channels-last.
    G = B * S
    x = new_points.reshape(G, K, -1)
    out = sa_mlp_pallas(x, params, max_tile_groups=max_tile_groups)   # (G, C_out)
    new_points_out = out.reshape(B, S, -1)            # == PyTorch (B, S, mlp[-1])
    # TODO(synk): BatchNorm running_mean/running_var momentum updates (stateful
    # side effect of the PyTorch module) are not produced; forward output only.
    return new_xyz, new_points_out


if __name__ == "__main__":
    key = jax.random.PRNGKey(0)
    k_xyz, k_pts, k_params, k_fps = jax.random.split(key, 4)

    B, N, D = 2, 32, 4                 # batch, points, feature channels
    npoint, radius, nsample = 10, 0.4, 8
    mlp = [16, 32]
    in_channel = 3 + D                 # grouped_xyz (3) concat point features (D)

    xyz = jax.random.uniform(k_xyz, (B, N, 3), jnp.float32)
    points = jax.random.normal(k_pts, (B, N, D), jnp.float32)
    params = init_params(k_params, in_channel, mlp)
    # torch.randint initial farthest index -> deterministic JAX equivalent
    fps_init = jax.random.randint(k_fps, (B,), 0, N, jnp.int32)

    new_xyz, new_points = pointnet_set_abstraction(
        xyz, points, params, fps_init,
        npoint=npoint, radius=radius, nsample=nsample, group_all=False,
        max_tile_groups=8)   # force a multi-tile, padded+masked grid at toy size

    jax.block_until_ready((new_xyz, new_points))
    assert new_xyz.shape == (B, npoint, 3)
    assert new_points.shape == (B, npoint, mlp[-1])
    assert bool(jnp.all(jnp.isfinite(new_points)))
    print("KERNEL_OK")
</pallas_src>

<mosaic_0001>
module attributes {stable_mosaic.version = 11 : i64} {
  func.func @_stats_kernel(%arg0: i32, %arg1: memref<64x7xbf16, #tpu.memory_space<vmem>>, %arg2: memref<7x128xbf16, #tpu.memory_space<vmem>>, %arg3: memref<2x128xf32, #tpu.memory_space<vmem>>, %arg4: memref<1x1x128xf32, #tpu.memory_space<vmem>>, %arg5: memref<1x128x128xf32, #tpu.memory_space<vmem>>) attributes {dimension_semantics = [#tpu.dimension_semantics<parallel>], iteration_bounds = array<i64: 3>, scalar_prefetch = 0 : i64, scratch_operands = 0 : i64, tpu.core_type = #tpu.core_type<tc>, window_params = [{transform_indices = @transform_0, window_bounds = array<i64: 64, 7>}, {pipeline_mode = #tpu.pipeline_mode<synchronous>, transform_indices = @transform_1, window_bounds = array<i64: 7, 128>}, {pipeline_mode = #tpu.pipeline_mode<synchronous>, transform_indices = @transform_2, window_bounds = array<i64: 2, 128>}, {transform_indices = @transform_3, window_bounds = array<i64: 1, 1, 128>}, {transform_indices = @transform_4, window_bounds = array<i64: 1, 128, 128>}]} {
    %c0 = arith.constant 0 : index
    %c0_0 = arith.constant 0 : index
    %0 = vector.load %arg1[%c0, %c0_0] : memref<64x7xbf16, #tpu.memory_space<vmem>>, vector<64x7xbf16>
    %c0_1 = arith.constant 0 : index
    %c0_2 = arith.constant 0 : index
    %1 = vector.load %arg2[%c0_1, %c0_2] : memref<7x128xbf16, #tpu.memory_space<vmem>>, vector<7x128xbf16>
    %cst = arith.constant dense<0.000000e+00> : vector<64x128xf32>
    %2 = tpu.matmul %0, %1, %cst {dimension_numbers = #tpu.dot_dimension_numbers<[1], [0], [0], [1], [0, 0, 1, 1], [], []>} : vector<64x7xbf16>, vector<7x128xbf16>, vector<64x128xf32> -> vector<64x128xf32>
    %c0_3 = arith.constant 0 : index
    %c0_4 = arith.constant 0 : index
    %3 = vector.load %arg3[%c0_3, %c0_4] : memref<2x128xf32, #tpu.memory_space<vmem>>, vector<1x128xf32>
    %4 = vector.broadcast %3 : vector<1x128xf32> to vector<64x128xf32>
    %5 = arith.mulf %2, %4 : vector<64x128xf32>
    %c1 = arith.constant 1 : index
    %c0_5 = arith.constant 0 : index
    %6 = vector.load %arg3[%c1, %c0_5] : memref<2x128xf32, #tpu.memory_space<vmem>>, vector<1x128xf32>
    %7 = vector.broadcast %6 : vector<1x128xf32> to vector<64x128xf32>
    %8 = arith.addf %5, %7 : vector<64x128xf32>
    %cst_6 = arith.constant 0.000000e+00 : f32
    %9 = vector.broadcast %cst_6 : f32 to vector<64x128xf32>
    %10 = arith.maximumf %8, %9 : vector<64x128xf32>
    %c64_i32 = arith.constant 64 : i32
    %11 = arith.muli %arg0, %c64_i32 : i32
    %12 = tpu.iota {dimensions = array<i32: 0>} : vector<64x1xi32>
    %13 = vector.broadcast %11 : i32 to vector<64x1xi32>
    %14 = arith.addi %13, %12 : vector<64x1xi32>
    %c160_i32 = arith.constant 160 : i32
    %15 = vector.broadcast %c160_i32 : i32 to vector<64x1xi32>
    %16 = arith.cmpi slt, %14, %15 : vector<64x1xi32>
    %cst_7 = arith.constant 0.000000e+00 : f32
    %17 = vector.shape_cast %16 : vector<64x1xi1> to vector<64x1xi1>
    %18 = vector.broadcast %17 : vector<64x1xi1> to vector<64x128xi1>
    %19 = vector.broadcast %cst_7 : f32 to vector<64x128xf32>
    %20 = arith.select %18, %10, %19 : vector<64x128xi1>, vector<64x128xf32>
    %cst_8 = arith.constant dense<0.000000e+00> : vector<128xf32>
    %21 = vector.multi_reduction <add>, %20, %cst_8 [0] : vector<64x128xf32> to vector<128xf32>
    %22 = vector.shape_cast %21 : vector<128xf32> to vector<1x128xf32>
    %c0_9 = arith.constant 0 : index
    %c0_10 = arith.constant 0 : index
    %c0_11 = arith.constant 0 : index
    %23 = vector.load %arg4[%c0_9, %c0_10, %c0_11] : memref<1x1x128xf32, #tpu.memory_space<vmem>>, vector<1x1x128xf32>
    %24 = vector.shape_cast %23 : vector<1x1x128xf32> to vector<1x128xf32>
    %25 = vector.shape_cast %22 : vector<1x128xf32> to vector<1x1x128xf32>
    tpu.vector_store %arg4[%c0_9, %c0_10, %c0_11], %25 {strides = array<i32>} : memref<1x1x128xf32, #tpu.memory_space<vmem>>, vector<1x1x128xf32>,
    %26 = tpu.transpose %20, [1, 0] : vector<64x128xf32> -> vector<128x64xf32>
    %cst_12 = arith.constant dense<0.000000e+00> : vector<128x128xf32>
    %27 = tpu.matmul %26, %20, %cst_12 {dimension_numbers = #tpu.dot_dimension_numbers<[1], [0], [0], [1], [0, 0, 1, 1], [], []>} : vector<128x64xf32>, vector<64x128xf32>, vector<128x128xf32> -> vector<128x128xf32>
    %c0_13 = arith.constant 0 : index
    %c0_14 = arith.constant 0 : index
    %c0_15 = arith.constant 0 : index
    %28 = vector.load %arg5[%c0_13, %c0_14, %c0_15] : memref<1x128x128xf32, #tpu.memory_space<vmem>>, vector<1x128x128xf32>
    %29 = vector.shape_cast %28 : vector<1x128x128xf32> to vector<128x128xf32>
    %30 = vector.shape_cast %27 : vector<128x128xf32> to vector<1x128x128xf32>
    tpu.vector_store %arg5[%c0_13, %c0_14, %c0_15], %30 {strides = array<i32>} : memref<1x128x128xf32, #tpu.memory_space<vmem>>, vector<1x128x128xf32>,
    return
  }
  func.func @transform_0(%arg0: i32) -> (i32, i32) {
    %c0_i32 = arith.constant 0 : i32
    %c0_i32_0 = arith.constant 0 : i32
    return %arg0, %c0_i32 : i32, i32
  }
  func.func @transform_1(%arg0: i32) -> (i32, i32) {
    %c0_i32 = arith.constant 0 : i32
    %c0_i32_0 = arith.constant 0 : i32
    %c0_i32_1 = arith.constant 0 : i32
    return %c0_i32, %c0_i32_0 : i32, i32
  }
  func.func @transform_2(%arg0: i32) -> (i32, i32) {
    %c0_i32 = arith.constant 0 : i32
    %c0_i32_0 = arith.constant 0 : i32
    %c0_i32_1 = arith.constant 0 : i32
    return %c0_i32, %c0_i32_0 : i32, i32
  }
  func.func @transform_3(%arg0: i32) -> (i32, i32, i32) {
    %c0_i32 = arith.constant 0 : i32
    %c0_i32_0 = arith.constant 0 : i32
    %c0_i32_1 = arith.constant 0 : i32
    return %arg0, %c0_i32, %c0_i32_0 : i32, i32, i32
  }
  func.func @transform_4(%arg0: i32) -> (i32, i32, i32) {
    %c0_i32 = arith.constant 0 : i32
    %c0_i32_0 = arith.constant 0 : i32
    %c0_i32_1 = arith.constant 0 : i32
    return %arg0, %c0_i32, %c0_i32_0 : i32, i32, i32
  }
}

module attributes {stable_mosaic.version = 11 : i64} {
  func.func @_fwd_kernel(%arg0: i32, %arg1: memref<64x7xbf16, #tpu.memory_space<vmem>>, %arg2: memref<7x128xbf16, #tpu.memory_space<vmem>>, %arg3: memref<128x128xbf16, #tpu.memory_space<vmem>>, %arg4: memref<2x128xf32, #tpu.memory_space<vmem>>, %arg5: memref<2x128xf32, #tpu.memory_space<vmem>>, %arg6: memref<8x128xf32, #tpu.memory_space<vmem>>) attributes {dimension_semantics = [#tpu.dimension_semantics<parallel>], iteration_bounds = array<i64: 3>, scalar_prefetch = 0 : i64, scratch_operands = 0 : i64, tpu.core_type = #tpu.core_type<tc>, window_params = [{transform_indices = @transform_0, window_bounds = array<i64: 64, 7>}, {pipeline_mode = #tpu.pipeline_mode<synchronous>, transform_indices = @transform_1, window_bounds = array<i64: 7, 128>}, {pipeline_mode = #tpu.pipeline_mode<synchronous>, transform_indices = @transform_2, window_bounds = array<i64: 128, 128>}, {pipeline_mode = #tpu.pipeline_mode<synchronous>, transform_indices = @transform_3, window_bounds = array<i64: 2, 128>}, {pipeline_mode = #tpu.pipeline_mode<synchronous>, transform_indices = @transform_4, window_bounds = array<i64: 2, 128>}, {transform_indices = @transform_5, window_bounds = array<i64: 8, 128>}]} {
    %c0 = arith.constant 0 : index
    %c0_0 = arith.constant 0 : index
    %0 = vector.load %arg1[%c0, %c0_0] : memref<64x7xbf16, #tpu.memory_space<vmem>>, vector<64x7xbf16>
    %c0_1 = arith.constant 0 : index
    %c0_2 = arith.constant 0 : index
    %1 = vector.load %arg2[%c0_1, %c0_2] : memref<7x128xbf16, #tpu.memory_space<vmem>>, vector<7x128xbf16>
    %cst = arith.constant dense<0.000000e+00> : vector<64x128xf32>
    %2 = tpu.matmul %0, %1, %cst {dimension_numbers = #tpu.dot_dimension_numbers<[1], [0], [0], [1], [0, 0, 1, 1], [], []>} : vector<64x7xbf16>, vector<7x128xbf16>, vector<64x128xf32> -> vector<64x128xf32>
    %c0_3 = arith.constant 0 : index
    %c0_4 = arith.constant 0 : index
    %3 = vector.load %arg4[%c0_3, %c0_4] : memref<2x128xf32, #tpu.memory_space<vmem>>, vector<1x128xf32>
    %c1 = arith.constant 1 : index
    %c0_5 = arith.constant 0 : index
    %4 = vector.load %arg4[%c1, %c0_5] : memref<2x128xf32, #tpu.memory_space<vmem>>, vector<1x128xf32>
    %5 = vector.broadcast %3 : vector<1x128xf32> to vector<64x128xf32>
    %6 = arith.mulf %2, %5 : vector<64x128xf32>
    %7 = vector.broadcast %4 : vector<1x128xf32> to vector<64x128xf32>
    %8 = arith.addf %6, %7 : vector<64x128xf32>
    %cst_6 = arith.constant 0.000000e+00 : f32
    %9 = vector.broadcast %cst_6 : f32 to vector<64x128xf32>
    %10 = arith.maximumf %8, %9 : vector<64x128xf32>
    %11 = arith.truncf %10 : vector<64x128xf32> to vector<64x128xbf16>
    %c0_7 = arith.constant 0 : index
    %c0_8 = arith.constant 0 : index
    %12 = vector.load %arg3[%c0_7, %c0_8] : memref<128x128xbf16, #tpu.memory_space<vmem>>, vector<128x128xbf16>
    %cst_9 = arith.constant dense<0.000000e+00> : vector<64x128xf32>
    %13 = tpu.matmul %11, %12, %cst_9 {dimension_numbers = #tpu.dot_dimension_numbers<[1], [0], [0], [1], [0, 0, 1, 1], [], []>} : vector<64x128xbf16>, vector<128x128xbf16>, vector<64x128xf32> -> vector<64x128xf32>
    %c0_10 = arith.constant 0 : index
    %c0_11 = arith.constant 0 : index
    %14 = vector.load %arg5[%c0_10, %c0_11] : memref<2x128xf32, #tpu.memory_space<vmem>>, vector<1x128xf32>
    %c1_12 = arith.constant 1 : index
    %c0_13 = arith.constant 0 : index
    %15 = vector.load %arg5[%c1_12, %c0_13] : memref<2x128xf32, #tpu.memory_space<vmem>>, vector<1x128xf32>
    %16 = vector.broadcast %14 : vector<1x128xf32> to vector<64x128xf32>
    %17 = arith.mulf %13, %16 : vector<64x128xf32>
    %18 = vector.broadcast %15 : vector<1x128xf32> to vector<64x128xf32>
    %19 = arith.addf %17, %18 : vector<64x128xf32>
    %cst_14 = arith.constant 0.000000e+00 : f32
    %20 = vector.broadcast %cst_14 : f32 to vector<64x128xf32>
    %21 = arith.maximumf %19, %20 : vector<64x128xf32>
    %22 = vector.shape_cast %21 : vector<64x128xf32> to vector<8x8x128xf32>
    %cst_15 = arith.constant dense<0xFF800000> : vector<8x128xf32>
    %23 = vector.multi_reduction <maximumf>, %22, %cst_15 [1] : vector<8x8x128xf32> to vector<8x128xf32>
    %c0_16 = arith.constant 0 : index
    %c0_17 = arith.constant 0 : index
    %24 = vector.load %arg6[%c0_16, %c0_17] : memref<8x128xf32, #tpu.memory_space<vmem>>, vector<8x128xf32>
    tpu.vector_store %arg6[%c0_16, %c0_17], %23 {strides = array<i32>} : memref<8x128xf32, #tpu.memory_space<vmem>>, vector<8x128xf32>,
    return
  }
  func.func @transform_0(%arg0: i32) -> (i32, i32) {
    %c0_i32 = arith.constant 0 : i32
    %c0_i32_0 = arith.constant 0 : i32
    return %arg0, %c0_i32 : i32, i32
  }
  func.func @transform_1(%arg0: i32) -> (i32, i32) {
    %c0_i32 = arith.constant 0 : i32
    %c0_i32_0 = arith.constant 0 : i32
    %c0_i32_1 = arith.constant 0 : i32
    return %c0_i32, %c0_i32_0 : i32, i32
  }
  func.func @transform_2(%arg0: i32) -> (i32, i32) {
    %c0_i32 = arith.constant 0 : i32
    %c0_i32_0 = arith.constant 0 : i32
    %c0_i32_1 = arith.constant 0 : i32
    return %c0_i32, %c0_i32_0 : i32, i32
  }
  func.func @transform_3(%arg0: i32) -> (i32, i32) {
    %c0_i32 = arith.constant 0 : i32
    %c0_i32_0 = arith.constant 0 : i32
    %c0_i32_1 = arith.constant 0 : i32
    return %c0_i32, %c0_i32_0 : i32, i32
  }
  func.func @transform_4(%arg0: i32) -> (i32, i32) {
    %c0_i32 = arith.constant 0 : i32
    %c0_i32_0 = arith.constant 0 : i32
    %c0_i32_1 = arith.constant 0 : i32
    return %c0_i32, %c0_i32_0 : i32, i32
  }
  func.func @transform_5(%arg0: i32) -> (i32, i32) {
    %c0_i32 = arith.constant 0 : i32
    %c0_i32_0 = arith.constant 0 : i32
    return %arg0, %c0_i32 : i32, i32
  }
}

</mosaic_0001>

<llo_original>
// kernel: custom-call.8
$region0: #{custom-call.8}
  %s0 = inlined_call_operand.vmem [shape: f32[2,32], index: 0, kind: output, shape index: {}]

// kernel: pointnet_set_abstraction.2
$region0: #{pointnet_set_abstraction.2}
  #allocation0 [shape = 'u32[]', space=smem, size = 0x4, offset = 0x4, fixed_abs, tag = 'smem constant byte address 0x4 - core index']
  #allocation1 [shape = 'u32[72,128]{1,0:T(1,128)}', space=vmem, size = 0x9000, scoped, tag = 'internal scratch']
  %s0 = inlined_call_operand.vmem [shape: bf16[192,7], index: 0, kind: input, shape index: {}]
  %s1 = inlined_call_operand.vmem [shape: bf16[7,128], index: 1, kind: input, shape index: {}]
  %s2 = inlined_call_operand.vmem [shape: f32[2,128], index: 2, kind: input, shape index: {}]
  %s3 = inlined_call_operand.vmem [shape: f32[3,1,128], index: 3, kind: output, shape index: {0}]
  %s4 = inlined_call_operand.vmem [shape: f32[3,128,128], index: 4, kind: output, shape index: {1}]
  %5 = xla_tuple %s3, %s4
  %s6 = sld [smem:[#allocation0]]
  $region53: #{pointnet_set_abstraction.2} parent=0
    _
  %s8 = ssub.s32 1, %s6
  %s9 = scalar_select 0, %s8, %s6
  loop: start=0, step=1, limit=5
  $region2: #{pointnet_set_abstraction.2} parent=0 // loop_pre_header
    _
  $region3: #{pointnet_set_abstraction.2} parent=0 // loop_header
    %s11 = sphi 0, %s15
    %p12 = scmp.ge.s32.totalorder %s11, 5
    %s21 = sphi 0, %s23
    %s24 = sphi 0, %s21
    %s25 = sphi 0, %s24
    %s41 = sphi 0, %s25
    %s45 = sphi 0, %s45
    %s47 = sphi 0, %s45
    %s48 = sphi 0, %s47
    %s62 = sphi 0, %s48
    %s66 = sphi 0, %s66
    %s68 = sphi 0, %s66
    %s69 = sphi 0, %s68
    %s83 = sphi 0, %s69
    %s89 = sphi 0, %s91
    %s92 = sphi 0, %s89
    %s93 = sphi 0, %s92
    %s109 = sphi 0, %s93
    %s115 = sphi 0, %s117
    %s118 = sphi 0, %s115
    %s119 = sphi 0, %s118
    %s135 = sphi 0, %s119
  $region4: #{pointnet_set_abstraction.2} parent=0 // loop_header_branch
    %14 = sbr.rel (%p12) target = $region8
  $region5: #{pointnet_set_abstraction.2} parent=0 // loop_body
    %s16 = ssub.s32 %s11, 1
    %s17 = ssub.s32 %s11, 2
    %s18 = sadd.s32 %s11, 1
    %s19 = ssub.s32 %s11, %s18
    %p20 = scmp.eq.s32.totalorder %s19, 0
    %s22 = sadd.s32 %s21, 1
    %s23 = scalar_select %p20, %s21, %s22
    %p26 = pneg %p20
    %p27 = scmp.eq.s32.totalorder %s11, 2
    %p28 = por %p26, %p27
    %p29 = scmp.ne.s32.totalorder %s21, %s24
    %p30 = scmp.eq.s32.totalorder %s11, 0
    %p31 = por %p29, %p30
    %p32 = scmp.ne.s32.totalorder %s21, %s24
    %p33 = scmp.eq.s32.totalorder %s16, 2
    %p34 = por %p32, %p33
    %p35 = scmp.ne.s32.totalorder %s24, %s25
    %p36 = scmp.eq.s32.totalorder %s16, 0
    %p37 = por %p35, %p36
    %p38 = scmp.ne.s32.totalorder %s24, %s25
    %p39 = scmp.eq.s32.totalorder %s17, 2
    %p40 = por %p38, %p39
    %p42 = scmp.ne.s32.totalorder %s25, %s41
    %p43 = scmp.eq.s32.totalorder %s17, 0
    %p44 = por %p42, %p43
    %s46 = sadd.s32 %s45, 1
    %p49 = scmp.eq.s32.totalorder %s11, 2
    %p50 = scmp.ne.s32.totalorder %s45, %s47
    %p51 = scmp.eq.s32.totalorder %s11, 0
    %p52 = por %p50, %p51
    %p53 = scmp.ne.s32.totalorder %s45, %s47
    %p54 = scmp.eq.s32.totalorder %s16, 2
    %p55 = por %p53, %p54
    %p56 = scmp.ne.s32.totalorder %s47, %s48
    %p57 = scmp.eq.s32.totalorder %s16, 0
    %p58 = por %p56, %p57
    %p59 = scmp.ne.s32.totalorder %s47, %s48
    %p60 = scmp.eq.s32.totalorder %s17, 2
    %p61 = por %p59, %p60
    %p63 = scmp.ne.s32.totalorder %s48, %s62
    %p64 = scmp.eq.s32.totalorder %s17, 0
    %p65 = por %p63, %p64
    %s67 = sadd.s32 %s66, 1
    %p70 = scmp.eq.s32.totalorder %s11, 2
    %p71 = scmp.ne.s32.totalorder %s66, %s68
    %p72 = scmp.eq.s32.totalorder %s11, 0
    %p73 = por %p71, %p72
    %p74 = scmp.ne.s32.totalorder %s66, %s68
    %p75 = scmp.eq.s32.totalorder %s16, 2
    %p76 = por %p74, %p75
    %p77 = scmp.ne.s32.totalorder %s68, %s69
    %p78 = scmp.eq.s32.totalorder %s16, 0
    %p79 = por %p77, %p78
    %p80 = scmp.ne.s32.totalorder %s68, %s69
    %p81 = scmp.eq.s32.totalorder %s17, 2
    %p82 = por %p80, %p81
    %p84 = scmp.ne.s32.totalorder %s69, %s83
    %p85 = scmp.eq.s32.totalorder %s17, 0
    %p86 = por %p84, %p85
    %s87 = ssub.s32 %s11, %s18
    %p88 = scmp.eq.s32.totalorder %s87, 0
    %s90 = sadd.s32 %s89, 1
    %s91 = scalar_select %p88, %s89, %s90
    %p94 = pneg %p88
    %p95 = scmp.eq.s32.totalorder %s11, 2
    %p96 = por %p94, %p95
    %p97 = scmp.ne.s32.totalorder %s89, %s92
    %p98 = scmp.eq.s32.totalorder %s11, 0
    %p99 = por %p97, %p98
    %p100 = scmp.ne.s32.totalorder %s89, %s92
    %p101 = scmp.eq.s32.totalorder %s16, 2
    %p102 = por %p100, %p101
    %p103 = scmp.ne.s32.totalorder %s92, %s93
    %p104 = scmp.eq.s32.totalorder %s16, 0
    %p105 = por %p103, %p104
    %p106 = scmp.ne.s32.totalorder %s92, %s93
    %p107 = scmp.eq.s32.totalorder %s17, 2
    %p108 = por %p106, %p107
    %p110 = scmp.ne.s32.totalorder %s93, %s109
    %p111 = scmp.eq.s32.totalorder %s17, 0
    %p112 = por %p110, %p111
    %s113 = ssub.s32 %s11, %s18
    %p114 = scmp.eq.s32.totalorder %s113, 0
    %s116 = sadd.s32 %s115, 1
    %s117 = scalar_select %p114, %s115, %s116
    %p120 = pneg %p114
    %p121 = scmp.eq.s32.totalorder %s11, 2
    %p122 = por %p120, %p121
    %p123 = scmp.ne.s32.totalorder %s115, %s118
    %p124 = scmp.eq.s32.totalorder %s11, 0
    %p125 = por %p123, %p124
    %p126 = scmp.ne.s32.totalorder %s115, %s118
    %p127 = scmp.eq.s32.totalorder %s16, 2
    %p128 = por %p126, %p127
    %p129 = scmp.ne.s32.totalorder %s118, %s119
    %p130 = scmp.eq.s32.totalorder %s16, 0
    %p131 = por %p129, %p130
    %p132 = scmp.ne.s32.totalorder %s118, %s119
    %p133 = scmp.eq.s32.totalorder %s17, 2
    %p134 = por %p132, %p133
    %p136 = scmp.ne.s32.totalorder %s119, %s135
    %p137 = scmp.eq.s32.totalorder %s17, 0
    %p138 = por %p136, %p137
    %p139 = scmp.le.s32.totalorder 1, %s11
    %p140 = scmp.lt.s32.totalorder %s11, 4
    %p141 = pnand %p139, %p140
    %p142 = pneg %p141
    // Predicated region
    $region9: #{pointnet_set_abstraction.2} parent=5 // pred_check
      _
    $region10: #{pointnet_set_abstraction.2} parent=5 // pred_check_branch
      %144 = sbr.rel (%p141) target = $region12
    $region11: #{pointnet_set_abstraction.2} parent=5 // pred_region
      %s145 = ssub.s32 %s11, 1
      // Predicated region
      $region13: #{pointnet_set_abstraction.2} parent=11 // pred_check
        %p146 = pneg %p58
      $region14: #{pointnet_set_abstraction.2} parent=11 // pred_check_branch
        %148 = sbr.rel (%p146) target = $region16
      $region15: #{pointnet_set_abstraction.2} parent=11 // pred_region
        _
      $region16: #{pointnet_set_abstraction.2} parent=11 // pred_fallthru
        _
      // Predicated region
      $region17: #{pointnet_set_abstraction.2} parent=11 // pred_check
        %p149 = pneg %p79
      $region18: #{pointnet_set_abstraction.2} parent=11 // pred_check_branch
        %151 = sbr.rel (%p149) target = $region20
      $region19: #{pointnet_set_abstraction.2} parent=11 // pred_region
        _
      $region20: #{pointnet_set_abstraction.2} parent=11 // pred_fallthru
        _
    $region12: #{pointnet_set_abstraction.2} parent=5 // pred_fallthru
      _
    %p152 = scmp.lt.s32.totalorder %s11, 3
    // Predicated region
    $region21: #{pointnet_set_abstraction.2} parent=5 // pred_check
      %p153 = pneg %p152
    $region22: #{pointnet_set_abstraction.2} parent=5 // pred_check_branch
      %155 = sbr.rel (%p153) target = $region24
    $region23: #{pointnet_set_abstraction.2} parent=5 // pred_region
      // Predicated region
      $region25: #{pointnet_set_abstraction.2} parent=23 // pred_check
        %p156 = pneg %p31
      $region26: #{pointnet_set_abstraction.2} parent=23 // pred_check_branch
        %158 = sbr.rel (%p156) target = $region28
      $region27: #{pointnet_set_abstraction.2} parent=23 // pred_region
        %s159 = smul.u32 8, %s11
        %p160 = scmp.lt.s32.totalorder %s159, 23
        %s161 = scalar_select %p160, %s159, 23
        %s162 = smul.addr %s161, 4
        %s163 = scalar_lea.vmem %s0, %s162
        %s164 = smul.u32 8, %s11
      $region28: #{pointnet_set_abstraction.2} parent=23 // pred_fallthru
        _
    $region24: #{pointnet_set_abstraction.2} parent=5 // pred_fallthru
      _
    %p165 = scmp.le.s32.totalorder 1, %s11
    %p166 = scmp.lt.s32.totalorder %s11, 4
    %p167 = pnand %p165, %p166
    %p168 = pneg %p167
    // Predicated region
    $region29: #{pointnet_set_abstraction.2} parent=5 // pred_check
      _
    $region30: #{pointnet_set_abstraction.2} parent=5 // pred_check_branch
      %170 = sbr.rel (%p167) target = $region32
    $region31: #{pointnet_set_abstraction.2} parent=5 // pred_region
      %s171 = ssub.s32 %s11, 1
      %s172 = smul.u32 8, %s16
      %p173 = scmp.lt.s32.totalorder %s172, 23
      %s174 = scalar_select %p173, %s172, 23
      %s175 = smul.addr %s174, 4
      %s176 = scalar_lea.vmem %s0, %s175
      %p177 = pneg %p37
      %p178 = pneg %p34
      %p179 = pneg %p58
      %p180 = pneg %p55
      %p181 = pneg %p79
      %p182 = pneg %p76
      %p183 = pneg %p105
      %p184 = pneg %p102
      %p185 = scmp.lt.s32.totalorder %s16, 2
      %s186 = scalar_select %p185, %s16, 2
      %s187 = scalar_lea.vmem %s3, %s186
      %p188 = pneg %p131
      %p189 = pneg %p128
      %p190 = scmp.lt.s32.totalorder %s16, 2
      %s191 = scalar_select %p190, %s16, 2
      %s192 = smul.addr %s191, 16
      %s193 = smul.addr %s192, 8
      %s194 = scalar_lea.vmem %s4, %s193
      %s195 = smul.u32 8, %s16
      %p196 = scmp.lt.s32.totalorder %s195, 23
      %s197 = scalar_select %p196, %s195, 23
      %s198 = smul.addr %s197, 4
      %s199 = scalar_lea.vmem %s0, %s198
      %s200 = smul.u32 8, %s16
      %p201 = scmp.lt.s32.totalorder %s16, 2
      %s202 = scalar_select %p201, %s16, 2
      %s203 = scalar_lea.vmem %s3, %s202
      %p204 = scmp.lt.s32.totalorder %s16, 2
      %s205 = scalar_select %p204, %s16, 2
      %s206 = smul.addr %s205, 16
      %s207 = smul.addr %s206, 8
      %s208 = scalar_lea.vmem %s4, %s207
      %v210 = vld [vmem:[%s199] sm:$0xf]
      %v211 = vld [vmem:[%s199 + $0x4] sm:$0xf]
      %v212 = vld [vmem:[%s199 + $0x8] sm:$0xf]
      %v213 = vld [vmem:[%s199 + $0xc] sm:$0xf]
      %v214 = vld [vmem:[%s199 + $0x10] sm:$0xf]
      %v215 = vld [vmem:[%s199 + $0x14] sm:$0xf]
      %v216 = vld [vmem:[%s199 + $0x18] sm:$0xf]
      %v217 = vld [vmem:[%s199 + $0x1c] sm:$0xf]
      %v218 = vld [vmem:[%s1] sm:$0xf]
      %v227 = vunpack.c.l.b16 %v210
      %v228 = vunpack.c.l.b16 %v211
      %v229 = vunpack.c.l.b16 %v212
      %v230 = vunpack.c.l.b16 %v213
      %v231 = vunpack.c.l.b16 %v214
      %v232 = vunpack.c.l.b16 %v215
      %v233 = vunpack.c.l.b16 %v216
      %v234 = vunpack.c.l.b16 %v217
      %v235 = vpack.c.b16 %v228, %v227
      %v236 = vpack.c.b16 %v230, %v229
      %v237 = vpack.c.b16 %v232, %v231
      %v238 = vpack.c.b16 %v234, %v233
      %vm239 = vcmask 56320
      %v241 = vsel %vm239, %v235, 0
      %v244 = vsel %vm239, %v236, 0
      %v247 = vsel %vm239, %v237, 0
      %v250 = vsel %vm239, %v238, 0
      %vm252 = vcmask 1042432
      %vm253 = vcmask 1043456
      %v254 = vsel %vm252, 4294967295, 65535
      %v255 = vsel %vm253, %v254, 0
      %v257 = vand.u32 %v218, %v255
      %259 = vmatpush.bf16.msra.mxu0 0
      %260 = vmatpush.bf16.msra.mxu0 0
      %261 = vmatpush.bf16.msra.mxu0 0
      %262 = vmatpush.bf16.msra.mxu0 0
      %263 = vmatpush.bf16.msra.mxu0 0
      %264 = vmatpush.bf16.msra.mxu0 0
      %265 = vmatpush.bf16.msra.mxu0 0
      %266 = vmatpush.bf16.msra.mxu0 %v257
      %267 = vmatmul.bf16.gmra.mxu0 %v241
      %v268 = vpop.f32.mrf.mxu0
      %v269 = vadd.f32 0.0, %v268
      %v270 = vpop.f32.mrf.mxu0
      %v271 = vadd.f32 0.0, %v270
      %272 = vmatmul.bf16.gmra.mxu0 %v244
      %v273 = vpop.f32.mrf.mxu0
      %v274 = vadd.f32 0.0, %v273
      %v275 = vpop.f32.mrf.mxu0
      %v276 = vadd.f32 0.0, %v275
      %277 = vmatmul.bf16.gmra.mxu0 %v247
      %v278 = vpop.f32.mrf.mxu0
      %v279 = vadd.f32 0.0, %v278
      %v280 = vpop.f32.mrf.mxu0
      %v281 = vadd.f32 0.0, %v280
      %282 = vmatmul.bf16.gmra.mxu0 %v250
      %v283 = vpop.f32.mrf.mxu0
      %v284 = vadd.f32 0.0, %v283
      %v285 = vpop.f32.mrf.mxu0
      %v286 = vadd.f32 0.0, %v285
      %287 = vdwg.mxu0
      %v288 = vld [vmem:[%s2] sm:$0x1]
      %v289 = vperm.slane %v288, 0
      %v290 = vmul.f32 %v269, %v289
      %v291 = vmul.f32 %v271, %v289
      %v292 = vmul.f32 %v274, %v289
      %v293 = vmul.f32 %v276, %v289
      %v294 = vmul.f32 %v279, %v289
      %v295 = vmul.f32 %v281, %v289
      %v296 = vmul.f32 %v284, %v289
      %v297 = vmul.f32 %v286, %v289
      %v298 = vld [vmem:[%s2 + $0x1] sm:$0x1]
      %v299 = vperm.slane %v298, 0
      %v300 = vadd.f32 %v290, %v299
      %v301 = vadd.f32 %v291, %v299
      %v302 = vadd.f32 %v292, %v299
      %v303 = vadd.f32 %v293, %v299
      %v304 = vadd.f32 %v294, %v299
      %v305 = vadd.f32 %v295, %v299
      %v306 = vadd.f32 %v296, %v299
      %v307 = vadd.f32 %v297, %v299
      %v308 = vmax.f32 %v300, 0.0
      %v309 = vmax.f32 %v301, 0.0
      %v310 = vmax.f32 %v302, 0.0
      %v311 = vmax.f32 %v303, 0.0
      %v312 = vmax.f32 %v304, 0.0
      %v313 = vmax.f32 %v305, 0.0
      %v314 = vmax.f32 %v306, 0.0
      %v315 = vmax.f32 %v307, 0.0
      %s316 = smul.u32 %s16, 64
      %v317 = vlaneseq
      %v318 = vshrl.u32 %v317, 7
      %v319 = vadd.s32 %v318, 8
      %v320 = vadd.s32 %v318, 16
      %v321 = vadd.s32 %v318, 24
      %v322 = vadd.s32 %v318, 32
      %v323 = vadd.s32 %v318, 40
      %v324 = vadd.s32 %v318, 48
      %v325 = vadd.s32 %v318, 56
      %v326 = vstv %s316
      %v327 = vadd.s32 %v326, %v318
      %v328 = vadd.s32 %v326, %v319
      %v329 = vadd.s32 %v326, %v320
      %v330 = vadd.s32 %v326, %v321
      %v331 = vadd.s32 %v326, %v322
      %v332 = vadd.s32 %v326, %v323
      %v333 = vadd.s32 %v326, %v324
      %v334 = vadd.s32 %v326, %v325
      %vm335 = vcmp.lt.s32.totalorder %v327, 160
      %vm336 = vcmp.lt.s32.totalorder %v328, 160
      %vm337 = vcmp.lt.s32.totalorder %v329, 160
      %vm338 = vcmp.lt.s32.totalorder %v330, 160
      %vm339 = vcmp.lt.s32.totalorder %v331, 160
      %vm340 = vcmp.lt.s32.totalorder %v332, 160
      %vm341 = vcmp.lt.s32.totalorder %v333, 160
      %vm342 = vcmp.lt.s32.totalorder %v334, 160
      %v343 = vsel %vm335, 1, 0
      %v344 = vsel %vm336, 1, 0
      %v345 = vsel %vm337, 1, 0
      %v346 = vsel %vm338, 1, 0
      %v347 = vsel %vm339, 1, 0
      %v348 = vsel %vm340, 1, 0
      %v349 = vsel %vm341, 1, 0
      %v350 = vsel %vm342, 1, 0
      %vm351 = vcmp.eq.s32.totalorder %v343, 1
      %vm352 = vcmp.eq.s32.totalorder %v344, 1
      %vm353 = vcmp.eq.s32.totalorder %v345, 1
      %vm354 = vcmp.eq.s32.totalorder %v346, 1
      %vm355 = vcmp.eq.s32.totalorder %v347, 1
      %vm356 = vcmp.eq.s32.totalorder %v348, 1
      %vm357 = vcmp.eq.s32.totalorder %v349, 1
      %vm358 = vcmp.eq.s32.totalorder %v350, 1
      %v359 = vsel %vm351, %v308, 0.0
      %v360 = vsel %vm352, %v309, 0.0
      %v361 = vsel %vm353, %v310, 0.0
      %v362 = vsel %vm354, %v311, 0.0
      %v363 = vsel %vm355, %v312, 0.0
      %v364 = vsel %vm356, %v313, 0.0
      %v365 = vsel %vm357, %v314, 0.0
      %v366 = vsel %vm358, %v315, 0.0
      %v367 = vadd.f32 %v359, %v360
      %v368 = vadd.f32 %v367, %v361
      %v369 = vadd.f32 %v368, %v362
      %v370 = vadd.f32 %v369, %v363
      %v371 = vadd.f32 %v370, %v364
      %v372 = vadd.f32 %v371, %v365
      %v373 = vadd.f32 %v372, %v366
      %v374 = vrot.slane %v373, 4
      %v375 = vadd.f32 %v373, %v374
      %v376 = vrot.slane %v375, 2
      %v377 = vadd.f32 %v375, %v376
      %v378 = vrot.slane %v377, 1
      %v379 = vadd.f32 %v377, %v378
      %380 = vst [vmem:[%s203] sm:$0x1] %v379
      %381 = vxpose.xlu0.b32.start [1/16] %v359, 128
      %382 = vxpose.xlu0.b32.cont [2/16] %v360, 128
      %383 = vxpose.xlu0.b32.cont [3/16] %v361, 128
      %384 = vxpose.xlu0.b32.cont [4/16] %v362, 128
      %385 = vxpose.xlu0.b32.cont [5/16] %v363, 128
      %386 = vxpose.xlu0.b32.cont [6/16] %v364, 128
      %387 = vxpose.xlu0.b32.cont [7/16] %v365, 128
      %388 = vxpose.xlu0.b32.cont [8/16] %v366, 128
      %389 = vxpose.xlu0.b32.cont [9/16] 0.0, 128
      %390 = vxpose.xlu0.b32.cont [10/16] 0.0, 128
      %391 = vxpose.xlu0.b32.cont [11/16] 0.0, 128
      %392 = vxpose.xlu0.b32.cont [12/16] 0.0, 128
      %393 = vxpose.xlu0.b32.cont [13/16] 0.0, 128
      %394 = vxpose.xlu0.b32.cont [14/16] 0.0, 128
      %395 = vxpose.xlu0.b32.cont [15/16] 0.0, 128
      %396 = vxpose.xlu0.b32.end [16/16] 0.0, 128
      %v397 = vpop.trf.xlu0
      %v398 = vpop.trf.xlu0
      %v399 = vpop.trf.xlu0
      %v400 = vpop.trf.xlu0
      %v401 = vpop.trf.xlu0
      %v402 = vpop.trf.xlu0
      %v403 = vpop.trf.xlu0
      %v404 = vpop.trf.xlu0
      %v405 = vpop.trf.xlu0
      %v406 = vpop.trf.xlu0
      %v407 = vpop.trf.xlu0
      %v408 = vpop.trf.xlu0
      %v409 = vpop.trf.xlu0
      %v410 = vpop.trf.xlu0
      %v411 = vpop.trf.xlu0
      %v412 = vpop.trf.xlu0
      %vm413 = vcmask 523264
      %v415 = vsel %vm413, %v397, 0
      %v418 = vsel %vm413, %v398, 0
      %v421 = vsel %vm413, %v399, 0
      %v424 = vsel %vm413, %v400, 0
      %v427 = vsel %vm413, %v401, 0
      %v430 = vsel %vm413, %v402, 0
      %v433 = vsel %vm413, %v403, 0
      %v436 = vsel %vm413, %v404, 0
      %v439 = vsel %vm413, %v405, 0
      %v442 = vsel %vm413, %v406, 0
      %v445 = vsel %vm413, %v407, 0
      %v448 = vsel %vm413, %v408, 0
      %v451 = vsel %vm413, %v409, 0
      %v454 = vsel %vm413, %v410, 0
      %v457 = vsel %vm413, %v411, 0
      %v460 = vsel %vm413, %v412, 0
      %462 = vmatpush.msra.mxu0 0.0
      %463 = vmatpush.msra.mxu0 0.0
      %464 = vmatpush.msra.mxu0 0.0
      %465 = vmatpush.msra.mxu0 0.0
      %466 = vmatpush.msra.mxu0 0.0
      %467 = vmatpush.msra.mxu0 0.0
      %468 = vmatpush.msra.mxu0 0.0
      %469 = vmatpush.msra.mxu0 0.0
      %470 = vmatpush.msra.mxu0 %v366
      %471 = vmatpush.msra.mxu0 %v365
      %472 = vmatpush.msra.mxu0 %v364
      %473 = vmatpush.msra.mxu0 %v363
      %474 = vmatpush.msra.mxu0 %v362
      %475 = vmatpush.msra.mxu0 %v361
      %476 = vmatpush.msra.mxu0 %v360
      %477 = vmatpush.msra.mxu0 %v359
      %478 = vmatmul.f32.gmra.mxu0 %v415
      %v479 = vpop.f32.mrf.mxu0
      %v480 = vadd.f32 0.0, %v479
      %481 = vmatmul.f32.gmra.mxu0 %v418
      %v482 = vpop.f32.mrf.mxu0
      %v483 = vadd.f32 0.0, %v482
      %484 = vmatmul.f32.gmra.mxu0 %v421
      %v485 = vpop.f32.mrf.mxu0
      %v486 = vadd.f32 0.0, %v485
      %487 = vmatmul.f32.gmra.mxu0 %v424
      %v488 = vpop.f32.mrf.mxu0
      %v489 = vadd.f32 0.0, %v488
      %490 = vmatmul.f32.gmra.mxu0 %v427
      %v491 = vpop.f32.mrf.mxu0
      %v492 = vadd.f32 0.0, %v491
      %493 = vmatmul.f32.gmra.mxu0 %v430
      %v494 = vpop.f32.mrf.mxu0
      %v495 = vadd.f32 0.0, %v494
      %496 = vmatmul.f32.gmra.mxu0 %v433
      %v497 = vpop.f32.mrf.mxu0
      %v498 = vadd.f32 0.0, %v497
      %499 = vmatmul.f32.gmra.mxu0 %v436
      %v500 = vpop.f32.mrf.mxu0
      %v501 = vadd.f32 0.0, %v500
      %502 = vmatmul.f32.gmra.mxu0 %v439
      %v503 = vpop.f32.mrf.mxu0
      %v504 = vadd.f32 0.0, %v503
      %505 = vmatmul.f32.gmra.mxu0 %v442
      %v506 = vpop.f32.mrf.mxu0
      %v507 = vadd.f32 0.0, %v506
      %508 = vmatmul.f32.gmra.mxu0 %v445
      %v509 = vpop.f32.mrf.mxu0
      %v510 = vadd.f32 0.0, %v509
      %511 = vmatmul.f32.gmra.mxu0 %v448
      %v512 = vpop.f32.mrf.mxu0
      %v513 = vadd.f32 0.0, %v512
      %514 = vmatmul.f32.gmra.mxu0 %v451
      %v515 = vpop.f32.mrf.mxu0
      %v516 = vadd.f32 0.0, %v515
      %517 = vmatmul.f32.gmra.mxu0 %v454
      %v518 = vpop.f32.mrf.mxu0
      %v519 = vadd.f32 0.0, %v518
      %520 = vmatmul.f32.gmra.mxu0 %v457
      %v521 = vpop.f32.mrf.mxu0
      %v522 = vadd.f32 0.0, %v521
      %523 = vmatmul.f32.gmra.mxu0 %v460
      %v524 = vpop.f32.mrf.mxu0
      %v525 = vadd.f32 0.0, %v524
      %526 = vdwg.mxu0
      %527 = vst [vmem:[%s208] sm:$0xff] %v480
      %528 = vst [vmem:[%s208 + $0x8] sm:$0xff] %v483
      %529 = vst [vmem:[%s208 + $0x10] sm:$0xff] %v486
      %530 = vst [vmem:[%s208 + $0x18] sm:$0xff] %v489
      %531 = vst [vmem:[%s208 + $0x20] sm:$0xff] %v492
      %532 = vst [vmem:[%s208 + $0x28] sm:$0xff] %v495
      %533 = vst [vmem:[%s208 + $0x30] sm:$0xff] %v498
      %534 = vst [vmem:[%s208 + $0x38] sm:$0xff] %v501
      %535 = vst [vmem:[%s208 + $0x40] sm:$0xff] %v504
      %536 = vst [vmem:[%s208 + $0x48] sm:$0xff] %v507
      %537 = vst [vmem:[%s208 + $0x50] sm:$0xff] %v510
      %538 = vst [vmem:[%s208 + $0x58] sm:$0xff] %v513
      %539 = vst [vmem:[%s208 + $0x60] sm:$0xff] %v516
      %540 = vst [vmem:[%s208 + $0x68] sm:$0xff] %v519
      %541 = vst [vmem:[%s208 + $0x70] sm:$0xff] %v522
      %542 = vst [vmem:[%s208 + $0x78] sm:$0xff] %v525
      %p543 = scmp.lt.s32.totalorder %s16, 2
      %s544 = scalar_select %p543, %s16, 2
      %s545 = scalar_lea.vmem %s3, %s544
      %p546 = scmp.lt.s32.totalorder %s16, 2
      %s547 = scalar_select %p546, %s16, 2
      %s548 = smul.addr %s547, 16
      %s549 = smul.addr %s548, 8
      %s550 = scalar_lea.vmem %s4, %s549
      // Predicated region
      $region33: #{pointnet_set_abstraction.2} parent=31 // pred_check
        %p551 = pneg %p102
      $region34: #{pointnet_set_abstraction.2} parent=31 // pred_check_branch
        %553 = sbr.rel (%p551) target = $region36
      $region35: #{pointnet_set_abstraction.2} parent=31 // pred_region
        _
      $region36: #{pointnet_set_abstraction.2} parent=31 // pred_fallthru
        _
      // Predicated region
      $region37: #{pointnet_set_abstraction.2} parent=31 // pred_check
        %p554 = pneg %p128
      $region38: #{pointnet_set_abstraction.2} parent=31 // pred_check_branch
        %556 = sbr.rel (%p554) target = $region40
      $region39: #{pointnet_set_abstraction.2} parent=31 // pred_region
        _
      $region40: #{pointnet_set_abstraction.2} parent=31 // pred_fallthru
        _
    $region32: #{pointnet_set_abstraction.2} parent=5 // pred_fallthru
      _
    %p557 = scmp.le.s32.totalorder 2, %s11
    // Predicated region
    $region41: #{pointnet_set_abstraction.2} parent=5 // pred_check
      %p558 = pneg %p557
    $region42: #{pointnet_set_abstraction.2} parent=5 // pred_check_branch
      %560 = sbr.rel (%p558) target = $region44
    $region43: #{pointnet_set_abstraction.2} parent=5 // pred_region
      %s561 = ssub.s32 %s11, 2
      // Predicated region
      $region45: #{pointnet_set_abstraction.2} parent=43 // pred_check
        %p562 = pneg %p108
      $region46: #{pointnet_set_abstraction.2} parent=43 // pred_check_branch
        %564 = sbr.rel (%p562) target = $region48
      $region47: #{pointnet_set_abstraction.2} parent=43 // pred_region
        %p565 = scmp.lt.s32.totalorder %s17, 2
        %s566 = scalar_select %p565, %s17, 2
        %s567 = scalar_lea.vmem %s3, %s566
      $region48: #{pointnet_set_abstraction.2} parent=43 // pred_fallthru
        _
      // Predicated region
      $region49: #{pointnet_set_abstraction.2} parent=43 // pred_check
        %p568 = pneg %p134
      $region50: #{pointnet_set_abstraction.2} parent=43 // pred_check_branch
        %570 = sbr.rel (%p568) target = $region52
      $region51: #{pointnet_set_abstraction.2} parent=43 // pred_region
        %p571 = scmp.lt.s32.totalorder %s17, 2
        %s572 = scalar_select %p571, %s17, 2
        %s573 = smul.addr %s572, 16
        %s574 = smul.addr %s573, 8
        %s575 = scalar_lea.vmem %s4, %s574
      $region52: #{pointnet_set_abstraction.2} parent=43 // pred_fallthru
        _
    $region44: #{pointnet_set_abstraction.2} parent=5 // pred_fallthru
      _
  $region6: #{pointnet_set_abstraction.2} parent=0 // loop_footer
    %s15 = sadd.s32 1, %s11
  $region7: #{pointnet_set_abstraction.2} parent=0 // loop_footer_branch
    %10 = sbr.rel target = $region3
  $region8: #{pointnet_set_abstraction.2} parent=0 // loop_exit
    _

// kernel: pointnet_set_abstraction.3
$region0: #{pointnet_set_abstraction.3}
  #allocation0 [shape = 'u32[]', space=smem, size = 0x4, offset = 0x4, fixed_abs, tag = 'smem constant byte address 0x4 - core index']
  #allocation1 [shape = 'u32[72,128]{1,0:T(1,128)}', space=vmem, size = 0x9000, scoped, tag = 'internal scratch']
  %s0 = inlined_call_operand.vmem [shape: bf16[192,7], index: 0, kind: input, shape index: {}]
  %s1 = inlined_call_operand.vmem [shape: bf16[7,128], index: 1, kind: input, shape index: {}]
  %s2 = inlined_call_operand.vmem [shape: bf16[128,128], index: 2, kind: input, shape index: {}]
  %s3 = inlined_call_operand.vmem [shape: f32[2,128], index: 3, kind: input, shape index: {}]
  %s4 = inlined_call_operand.vmem [shape: f32[2,128], index: 4, kind: input, shape index: {}]
  %s5 = inlined_call_operand.vmem [shape: f32[24,128], index: 5, kind: output, shape index: {}]
  %s6 = sld [smem:[#allocation0]]
  $region53: #{pointnet_set_abstraction.3} parent=0
    _
  %s8 = ssub.s32 1, %s6
  %s9 = scalar_select 0, %s8, %s6
  loop: start=0, step=1, limit=5
  $region2: #{pointnet_set_abstraction.3} parent=0 // loop_pre_header
    _
  $region3: #{pointnet_set_abstraction.3} parent=0 // loop_header
    %s11 = sphi 0, %s15
    %p12 = scmp.ge.s32.totalorder %s11, 5
    %s21 = sphi 0, %s23
    %s24 = sphi 0, %s21
    %s25 = sphi 0, %s24
    %s41 = sphi 0, %s25
    %s45 = sphi 0, %s45
    %s47 = sphi 0, %s45
    %s48 = sphi 0, %s47
    %s62 = sphi 0, %s48
    %s66 = sphi 0, %s66
    %s68 = sphi 0, %s66
    %s69 = sphi 0, %s68
    %s83 = sphi 0, %s69
    %s87 = sphi 0, %s87
    %s89 = sphi 0, %s87
    %s90 = sphi 0, %s89
    %s104 = sphi 0, %s90
    %s108 = sphi 0, %s108
    %s110 = sphi 0, %s108
    %s111 = sphi 0, %s110
    %s125 = sphi 0, %s111
    %s131 = sphi 0, %s133
    %s134 = sphi 0, %s131
    %s135 = sphi 0, %s134
    %s151 = sphi 0, %s135
  $region4: #{pointnet_set_abstraction.3} parent=0 // loop_header_branch
    %14 = sbr.rel (%p12) target = $region8
  $region5: #{pointnet_set_abstraction.3} parent=0 // loop_body
    %s16 = ssub.s32 %s11, 1
    %s17 = ssub.s32 %s11, 2
    %s18 = sadd.s32 %s11, 1
    %s19 = ssub.s32 %s11, %s18
    %p20 = scmp.eq.s32.totalorder %s19, 0
    %s22 = sadd.s32 %s21, 1
    %s23 = scalar_select %p20, %s21, %s22
    %p26 = pneg %p20
    %p27 = scmp.eq.s32.totalorder %s11, 2
    %p28 = por %p26, %p27
    %p29 = scmp.ne.s32.totalorder %s21, %s24
    %p30 = scmp.eq.s32.totalorder %s11, 0
    %p31 = por %p29, %p30
    %p32 = scmp.ne.s32.totalorder %s21, %s24
    %p33 = scmp.eq.s32.totalorder %s16, 2
    %p34 = por %p32, %p33
    %p35 = scmp.ne.s32.totalorder %s24, %s25
    %p36 = scmp.eq.s32.totalorder %s16, 0
    %p37 = por %p35, %p36
    %p38 = scmp.ne.s32.totalorder %s24, %s25
    %p39 = scmp.eq.s32.totalorder %s17, 2
    %p40 = por %p38, %p39
    %p42 = scmp.ne.s32.totalorder %s25, %s41
    %p43 = scmp.eq.s32.totalorder %s17, 0
    %p44 = por %p42, %p43
    %s46 = sadd.s32 %s45, 1
    %p49 = scmp.eq.s32.totalorder %s11, 2
    %p50 = scmp.ne.s32.totalorder %s45, %s47
    %p51 = scmp.eq.s32.totalorder %s11, 0
    %p52 = por %p50, %p51
    %p53 = scmp.ne.s32.totalorder %s45, %s47
    %p54 = scmp.eq.s32.totalorder %s16, 2
    %p55 = por %p53, %p54
    %p56 = scmp.ne.s32.totalorder %s47, %s48
    %p57 = scmp.eq.s32.totalorder %s16, 0
    %p58 = por %p56, %p57
    %p59 = scmp.ne.s32.totalorder %s47, %s48
    %p60 = scmp.eq.s32.totalorder %s17, 2
    %p61 = por %p59, %p60
    %p63 = scmp.ne.s32.totalorder %s48, %s62
    %p64 = scmp.eq.s32.totalorder %s17, 0
    %p65 = por %p63, %p64
    %s67 = sadd.s32 %s66, 1
    %p70 = scmp.eq.s32.totalorder %s11, 2
    %p71 = scmp.ne.s32.totalorder %s66, %s68
    %p72 = scmp.eq.s32.totalorder %s11, 0
    %p73 = por %p71, %p72
    %p74 = scmp.ne.s32.totalorder %s66, %s68
    %p75 = scmp.eq.s32.totalorder %s16, 2
    %p76 = por %p74, %p75
    %p77 = scmp.ne.s32.totalorder %s68, %s69
    %p78 = scmp.eq.s32.totalorder %s16, 0
    %p79 = por %p77, %p78
    %p80 = scmp.ne.s32.totalorder %s68, %s69
    %p81 = scmp.eq.s32.totalorder %s17, 2
    %p82 = por %p80, %p81
    %p84 = scmp.ne.s32.totalorder %s69, %s83
    %p85 = scmp.eq.s32.totalorder %s17, 0
    %p86 = por %p84, %p85
    %s88 = sadd.s32 %s87, 1
    %p91 = scmp.eq.s32.totalorder %s11, 2
    %p92 = scmp.ne.s32.totalorder %s87, %s89
    %p93 = scmp.eq.s32.totalorder %s11, 0
    %p94 = por %p92, %p93
    %p95 = scmp.ne.s32.totalorder %s87, %s89
    %p96 = scmp.eq.s32.totalorder %s16, 2
    %p97 = por %p95, %p96
    %p98 = scmp.ne.s32.totalorder %s89, %s90
    %p99 = scmp.eq.s32.totalorder %s16, 0
    %p100 = por %p98, %p99
    %p101 = scmp.ne.s32.totalorder %s89, %s90
    %p102 = scmp.eq.s32.totalorder %s17, 2
    %p103 = por %p101, %p102
    %p105 = scmp.ne.s32.totalorder %s90, %s104
    %p106 = scmp.eq.s32.totalorder %s17, 0
    %p107 = por %p105, %p106
    %s109 = sadd.s32 %s108, 1
    %p112 = scmp.eq.s32.totalorder %s11, 2
    %p113 = scmp.ne.s32.totalorder %s108, %s110
    %p114 = scmp.eq.s32.totalorder %s11, 0
    %p115 = por %p113, %p114
    %p116 = scmp.ne.s32.totalorder %s108, %s110
    %p117 = scmp.eq.s32.totalorder %s16, 2
    %p118 = por %p116, %p117
    %p119 = scmp.ne.s32.totalorder %s110, %s111
    %p120 = scmp.eq.s32.totalorder %s16, 0
    %p121 = por %p119, %p120
    %p122 = scmp.ne.s32.totalorder %s110, %s111
    %p123 = scmp.eq.s32.totalorder %s17, 2
    %p124 = por %p122, %p123
    %p126 = scmp.ne.s32.totalorder %s111, %s125
    %p127 = scmp.eq.s32.totalorder %s17, 0
    %p128 = por %p126, %p127
    %s129 = ssub.s32 %s11, %s18
    %p130 = scmp.eq.s32.totalorder %s129, 0
    %s132 = sadd.s32 %s131, 1
    %s133 = scalar_select %p130, %s131, %s132
    %p136 = pneg %p130
    %p137 = scmp.eq.s32.totalorder %s11, 2
    %p138 = por %p136, %p137
    %p139 = scmp.ne.s32.totalorder %s131, %s134
    %p140 = scmp.eq.s32.totalorder %s11, 0
    %p141 = por %p139, %p140
    %p142 = scmp.ne.s32.totalorder %s131, %s134
    %p143 = scmp.eq.s32.totalorder %s16, 2
    %p144 = por %p142, %p143
    %p145 = scmp.ne.s32.totalorder %s134, %s135
    %p146 = scmp.eq.s32.totalorder %s16, 0
    %p147 = por %p145, %p146
    %p148 = scmp.ne.s32.totalorder %s134, %s135
    %p149 = scmp.eq.s32.totalorder %s17, 2
    %p150 = por %p148, %p149
    %p152 = scmp.ne.s32.totalorder %s135, %s151
    %p153 = scmp.eq.s32.totalorder %s17, 0
    %p154 = por %p152, %p153
    %p155 = scmp.le.s32.totalorder 1, %s11
    %p156 = scmp.lt.s32.totalorder %s11, 4
    %p157 = pnand %p155, %p156
    %p158 = pneg %p157
    // Predicated region
    $region9: #{pointnet_set_abstraction.3} parent=5 // pred_check
      _
    $region10: #{pointnet_set_abstraction.3} parent=5 // pred_check_branch
      %160 = sbr.rel (%p157) target = $region12
    $region11: #{pointnet_set_abstraction.3} parent=5 // pred_region
      %s161 = ssub.s32 %s11, 1
      // Predicated region
      $region13: #{pointnet_set_abstraction.3} parent=11 // pred_check
        %p162 = pneg %p58
      $region14: #{pointnet_set_abstraction.3} parent=11 // pred_check_branch
        %164 = sbr.rel (%p162) target = $region16
      $region15: #{pointnet_set_abstraction.3} parent=11 // pred_region
        _
      $region16: #{pointnet_set_abstraction.3} parent=11 // pred_fallthru
        _
      // Predicated region
      $region17: #{pointnet_set_abstraction.3} parent=11 // pred_check
        %p165 = pneg %p79
      $region18: #{pointnet_set_abstraction.3} parent=11 // pred_check_branch
        %167 = sbr.rel (%p165) target = $region20
      $region19: #{pointnet_set_abstraction.3} parent=11 // pred_region
        _
      $region20: #{pointnet_set_abstraction.3} parent=11 // pred_fallthru
        _
      // Predicated region
      $region21: #{pointnet_set_abstraction.3} parent=11 // pred_check
        %p168 = pneg %p100
      $region22: #{pointnet_set_abstraction.3} parent=11 // pred_check_branch
        %170 = sbr.rel (%p168) target = $region24
      $region23: #{pointnet_set_abstraction.3} parent=11 // pred_region
        _
      $region24: #{pointnet_set_abstraction.3} parent=11 // pred_fallthru
        _
      // Predicated region
      $region25: #{pointnet_set_abstraction.3} parent=11 // pred_check
        %p171 = pneg %p121
      $region26: #{pointnet_set_abstraction.3} parent=11 // pred_check_branch
        %173 = sbr.rel (%p171) target = $region28
      $region27: #{pointnet_set_abstraction.3} parent=11 // pred_region
        _
      $region28: #{pointnet_set_abstraction.3} parent=11 // pred_fallthru
        _
    $region12: #{pointnet_set_abstraction.3} parent=5 // pred_fallthru
      _
    %p174 = scmp.lt.s32.totalorder %s11, 3
    // Predicated region
    $region29: #{pointnet_set_abstraction.3} parent=5 // pred_check
      %p175 = pneg %p174
    $region30: #{pointnet_set_abstraction.3} parent=5 // pred_check_branch
      %177 = sbr.rel (%p175) target = $region32
    $region31: #{pointnet_set_abstraction.3} parent=5 // pred_region
      // Predicated region
      $region33: #{pointnet_set_abstraction.3} parent=31 // pred_check
        %p178 = pneg %p31
      $region34: #{pointnet_set_abstraction.3} parent=31 // pred_check_branch
        %180 = sbr.rel (%p178) target = $region36
      $region35: #{pointnet_set_abstraction.3} parent=31 // pred_region
        %s181 = smul.u32 8, %s11
        %p182 = scmp.lt.s32.totalorder %s181, 23
        %s183 = scalar_select %p182, %s181, 23
        %s184 = smul.addr %s183, 4
        %s185 = scalar_lea.vmem %s0, %s184
        %s186 = smul.u32 8, %s11
      $region36: #{pointnet_set_abstraction.3} parent=31 // pred_fallthru
        _
    $region32: #{pointnet_set_abstraction.3} parent=5 // pred_fallthru
      _
    %p187 = scmp.le.s32.totalorder 1, %s11
    %p188 = scmp.lt.s32.totalorder %s11, 4
    %p189 = pnand %p187, %p188
    %p190 = pneg %p189
    // Predicated region
    $region37: #{pointnet_set_abstraction.3} parent=5 // pred_check
      _
    $region38: #{pointnet_set_abstraction.3} parent=5 // pred_check_branch
      %192 = sbr.rel (%p189) target = $region40
    $region39: #{pointnet_set_abstraction.3} parent=5 // pred_region
      %s193 = ssub.s32 %s11, 1
      %s194 = smul.u32 8, %s16
      %p195 = scmp.lt.s32.totalorder %s194, 23
      %s196 = scalar_select %p195, %s194, 23
      %s197 = smul.addr %s196, 4
      %s198 = scalar_lea.vmem %s0, %s197
      %p199 = pneg %p37
      %p200 = pneg %p34
      %p201 = pneg %p58
      %p202 = pneg %p55
      %p203 = pneg %p79
      %p204 = pneg %p76
      %p205 = pneg %p100
      %p206 = pneg %p97
      %p207 = pneg %p121
      %p208 = pneg %p118
      %p209 = pneg %p147
      %p210 = pneg %p144
      %p211 = scmp.lt.s32.totalorder %s16, 2
      %s212 = scalar_select %p211, %s16, 2
      %s213 = smul.addr %s212, 8
      %s214 = scalar_lea.vmem %s5, %s213
      %s215 = smul.u32 8, %s16
      %p216 = scmp.lt.s32.totalorder %s215, 23
      %s217 = scalar_select %p216, %s215, 23
      %s218 = smul.addr %s217, 4
      %s219 = scalar_lea.vmem %s0, %s218
      %s220 = smul.u32 8, %s16
      %p221 = scmp.lt.s32.totalorder %s16, 2
      %s222 = scalar_select %p221, %s16, 2
      %s223 = smul.addr %s222, 8
      %s224 = scalar_lea.vmem %s5, %s223
      %v226 = vld [vmem:[%s219] sm:$0xf]
      %v227 = vld [vmem:[%s219 + $0x4] sm:$0xf]
      %v228 = vld [vmem:[%s219 + $0x8] sm:$0xf]
      %v229 = vld [vmem:[%s219 + $0xc] sm:$0xf]
      %v230 = vld [vmem:[%s219 + $0x10] sm:$0xf]
      %v231 = vld [vmem:[%s219 + $0x14] sm:$0xf]
      %v232 = vld [vmem:[%s219 + $0x18] sm:$0xf]
      %v233 = vld [vmem:[%s219 + $0x1c] sm:$0xf]
      %v234 = vld [vmem:[%s1] sm:$0xf]
      %v243 = vunpack.c.l.b16 %v226
      %v244 = vunpack.c.l.b16 %v227
      %v245 = vunpack.c.l.b16 %v228
      %v246 = vunpack.c.l.b16 %v229
      %v247 = vunpack.c.l.b16 %v230
      %v248 = vunpack.c.l.b16 %v231
      %v249 = vunpack.c.l.b16 %v232
      %v250 = vunpack.c.l.b16 %v233
      %v251 = vpack.c.b16 %v244, %v243
      %v252 = vpack.c.b16 %v246, %v245
      %v253 = vpack.c.b16 %v248, %v247
      %v254 = vpack.c.b16 %v250, %v249
      %vm255 = vcmask 56320
      %v257 = vsel %vm255, %v251, 0
      %v260 = vsel %vm255, %v252, 0
      %v263 = vsel %vm255, %v253, 0
      %v266 = vsel %vm255, %v254, 0
      %vm268 = vcmask 1042432
      %vm269 = vcmask 1043456
      %v270 = vsel %vm268, 4294967295, 65535
      %v271 = vsel %vm269, %v270, 0
      %v273 = vand.u32 %v234, %v271
      %275 = vmatpush.bf16.msra.mxu0 0
      %276 = vmatpush.bf16.msra.mxu0 0
      %277 = vmatpush.bf16.msra.mxu0 0
      %278 = vmatpush.bf16.msra.mxu0 0
      %279 = vmatpush.bf16.msra.mxu0 0
      %280 = vmatpush.bf16.msra.mxu0 0
      %281 = vmatpush.bf16.msra.mxu0 0
      %282 = vmatpush.bf16.msra.mxu0 %v273
      %283 = vmatmul.bf16.gmra.mxu0 %v257
      %v284 = vpop.f32.mrf.mxu0
      %v285 = vadd.f32 0.0, %v284
      %v286 = vpop.f32.mrf.mxu0
      %v287 = vadd.f32 0.0, %v286
      %288 = vmatmul.bf16.gmra.mxu0 %v260
      %v289 = vpop.f32.mrf.mxu0
      %v290 = vadd.f32 0.0, %v289
      %v291 = vpop.f32.mrf.mxu0
      %v292 = vadd.f32 0.0, %v291
      %293 = vmatmul.bf16.gmra.mxu0 %v263
      %v294 = vpop.f32.mrf.mxu0
      %v295 = vadd.f32 0.0, %v294
      %v296 = vpop.f32.mrf.mxu0
      %v297 = vadd.f32 0.0, %v296
      %298 = vmatmul.bf16.gmra.mxu0 %v266
      %v299 = vpop.f32.mrf.mxu0
      %v300 = vadd.f32 0.0, %v299
      %v301 = vpop.f32.mrf.mxu0
      %v302 = vadd.f32 0.0, %v301
      %303 = vdwg.mxu0
      %v304 = vld [vmem:[%s3] sm:$0x1]
      %v305 = vld [vmem:[%s3 + $0x1] sm:$0x1]
      %v306 = vperm.slane %v304, 0
      %v307 = vmul.f32 %v285, %v306
      %v308 = vmul.f32 %v287, %v306
      %v309 = vmul.f32 %v290, %v306
      %v310 = vmul.f32 %v292, %v306
      %v311 = vmul.f32 %v295, %v306
      %v312 = vmul.f32 %v297, %v306
      %v313 = vmul.f32 %v300, %v306
      %v314 = vmul.f32 %v302, %v306
      %v315 = vperm.slane %v305, 0
      %v316 = vadd.f32 %v307, %v315
      %v317 = vadd.f32 %v308, %v315
      %v318 = vadd.f32 %v309, %v315
      %v319 = vadd.f32 %v310, %v315
      %v320 = vadd.f32 %v311, %v315
      %v321 = vadd.f32 %v312, %v315
      %v322 = vadd.f32 %v313, %v315
      %v323 = vadd.f32 %v314, %v315
      %v324 = vmax.f32 %v316, 0.0
      %v325 = vmax.f32 %v317, 0.0
      %v326 = vmax.f32 %v318, 0.0
      %v327 = vmax.f32 %v319, 0.0
      %v328 = vmax.f32 %v320, 0.0
      %v329 = vmax.f32 %v321, 0.0
      %v330 = vmax.f32 %v322, 0.0
      %v331 = vmax.f32 %v323, 0.0
      %v332 = vpack.c.bf16 %v325, %v324
      %v333 = vpack.c.bf16 %v327, %v326
      %v334 = vpack.c.bf16 %v329, %v328
      %v335 = vpack.c.bf16 %v331, %v330
      %v336 = vld [vmem:[%s2] sm:$0xf]
      %v337 = vld [vmem:[%s2 + $0x4] sm:$0xf]
      %v338 = vld [vmem:[%s2 + $0x8] sm:$0xf]
      %v339 = vld [vmem:[%s2 + $0xc] sm:$0xf]
      %v340 = vld [vmem:[%s2 + $0x10] sm:$0xf]
      %v341 = vld [vmem:[%s2 + $0x14] sm:$0xf]
      %v342 = vld [vmem:[%s2 + $0x18] sm:$0xf]
      %v343 = vld [vmem:[%s2 + $0x1c] sm:$0xf]
      %v344 = vld [vmem:[%s2 + $0x20] sm:$0xf]
      %v345 = vld [vmem:[%s2 + $0x24] sm:$0xf]
      %v346 = vld [vmem:[%s2 + $0x28] sm:$0xf]
      %v347 = vld [vmem:[%s2 + $0x2c] sm:$0xf]
      %v348 = vld [vmem:[%s2 + $0x30] sm:$0xf]
      %v349 = vld [vmem:[%s2 + $0x34] sm:$0xf]
      %v350 = vld [vmem:[%s2 + $0x38] sm:$0xf]
      %v351 = vld [vmem:[%s2 + $0x3c] sm:$0xf]
      %v368 = vunpack.c.l.b16 %v336
      %v369 = vunpack.c.l.b16 %v337
      %v370 = vunpack.c.l.b16 %v338
      %v371 = vunpack.c.l.b16 %v339
      %v372 = vunpack.c.l.b16 %v340
      %v373 = vunpack.c.l.b16 %v341
      %v374 = vunpack.c.l.b16 %v342
      %v375 = vunpack.c.l.b16 %v343
      %v376 = vunpack.c.l.b16 %v344
      %v377 = vunpack.c.l.b16 %v345
      %v378 = vunpack.c.l.b16 %v346
      %v379 = vunpack.c.l.b16 %v347
      %v380 = vunpack.c.l.b16 %v348
      %v381 = vunpack.c.l.b16 %v349
      %v382 = vunpack.c.l.b16 %v350
      %v383 = vunpack.c.l.b16 %v351
      %v384 = vpack.c.b16 %v369, %v368
      %v385 = vpack.c.b16 %v371, %v370
      %v386 = vpack.c.b16 %v373, %v372
      %v387 = vpack.c.b16 %v375, %v374
      %v388 = vpack.c.b16 %v377, %v376
      %v389 = vpack.c.b16 %v379, %v378
      %v390 = vpack.c.b16 %v381, %v380
      %v391 = vpack.c.b16 %v383, %v382
      %400 = vmatpush.bf16.msra.mxu0 %v391
      %401 = vmatpush.bf16.msra.mxu0 %v390
      %402 = vmatpush.bf16.msra.mxu0 %v389
      %403 = vmatpush.bf16.msra.mxu0 %v388
      %404 = vmatpush.bf16.msra.mxu0 %v387
      %405 = vmatpush.bf16.msra.mxu0 %v386
      %406 = vmatpush.bf16.msra.mxu0 %v385
      %407 = vmatpush.bf16.msra.mxu0 %v384
      %408 = vmatmul.bf16.gmra.mxu0 %v332
      %v409 = vpop.f32.mrf.mxu0
      %v410 = vadd.f32 0.0, %v409
      %v411 = vpop.f32.mrf.mxu0
      %v412 = vadd.f32 0.0, %v411
      %413 = vmatmul.bf16.gmra.mxu0 %v333
      %v414 = vpop.f32.mrf.mxu0
      %v415 = vadd.f32 0.0, %v414
      %v416 = vpop.f32.mrf.mxu0
      %v417 = vadd.f32 0.0, %v416
      %418 = vmatmul.bf16.gmra.mxu0 %v334
      %v419 = vpop.f32.mrf.mxu0
      %v420 = vadd.f32 0.0, %v419
      %v421 = vpop.f32.mrf.mxu0
      %v422 = vadd.f32 0.0, %v421
      %423 = vmatmul.bf16.gmra.mxu0 %v335
      %v424 = vpop.f32.mrf.mxu0
      %v425 = vadd.f32 0.0, %v424
      %v426 = vpop.f32.mrf.mxu0
      %v427 = vadd.f32 0.0, %v426
      %428 = vdwg.mxu0
      %v429 = vld [vmem:[%s4] sm:$0x1]
      %v430 = vld [vmem:[%s4 + $0x1] sm:$0x1]
      %v431 = vperm.slane %v429, 0
      %v432 = vmul.f32 %v410, %v431
      %v433 = vmul.f32 %v412, %v431
      %v434 = vmul.f32 %v415, %v431
      %v435 = vmul.f32 %v417, %v431
      %v436 = vmul.f32 %v420, %v431
      %v437 = vmul.f32 %v422, %v431
      %v438 = vmul.f32 %v425, %v431
      %v439 = vmul.f32 %v427, %v431
      %v440 = vperm.slane %v430, 0
      %v441 = vadd.f32 %v432, %v440
      %v442 = vadd.f32 %v433, %v440
      %v443 = vadd.f32 %v434, %v440
      %v444 = vadd.f32 %v435, %v440
      %v445 = vadd.f32 %v436, %v440
      %v446 = vadd.f32 %v437, %v440
      %v447 = vadd.f32 %v438, %v440
      %v448 = vadd.f32 %v439, %v440
      %v449 = vmax.f32 %v441, 0.0
      %v450 = vmax.f32 %v442, 0.0
      %v451 = vmax.f32 %v443, 0.0
      %v452 = vmax.f32 %v444, 0.0
      %v453 = vmax.f32 %v445, 0.0
      %v454 = vmax.f32 %v446, 0.0
      %v455 = vmax.f32 %v447, 0.0
      %v456 = vmax.f32 %v448, 0.0
      %v457 = vrot.slane %v449, 4
      %v458 = vmax.f32 %v449, %v457
      %v459 = vrot.slane %v458, 2
      %v460 = vmax.f32 %v458, %v459
      %v461 = vrot.slane %v460, 1
      %v462 = vmax.f32 %v460, %v461
      %v463 = vrot.slane %v450, 4
      %v464 = vmax.f32 %v450, %v463
      %v465 = vrot.slane %v464, 2
      %v466 = vmax.f32 %v464, %v465
      %v467 = vrot.slane %v466, 1
      %v468 = vmax.f32 %v466, %v467
      %v469 = vrot.slane %v451, 4
      %v470 = vmax.f32 %v451, %v469
      %v471 = vrot.slane %v470, 2
      %v472 = vmax.f32 %v470, %v471
      %v473 = vrot.slane %v472, 1
      %v474 = vmax.f32 %v472, %v473
      %v475 = vrot.slane %v452, 4
      %v476 = vmax.f32 %v452, %v475
      %v477 = vrot.slane %v476, 2
      %v478 = vmax.f32 %v476, %v477
      %v479 = vrot.slane %v478, 1
      %v480 = vmax.f32 %v478, %v479
      %v481 = vrot.slane %v453, 4
      %v482 = vmax.f32 %v453, %v481
      %v483 = vrot.slane %v482, 2
      %v484 = vmax.f32 %v482, %v483
      %v485 = vrot.slane %v484, 1
      %v486 = vmax.f32 %v484, %v485
      %v487 = vrot.slane %v454, 4
      %v488 = vmax.f32 %v454, %v487
      %v489 = vrot.slane %v488, 2
      %v490 = vmax.f32 %v488, %v489
      %v491 = vrot.slane %v490, 1
      %v492 = vmax.f32 %v490, %v491
      %v493 = vrot.slane %v455, 4
      %v494 = vmax.f32 %v455, %v493
      %v495 = vrot.slane %v494, 2
      %v496 = vmax.f32 %v494, %v495
      %v497 = vrot.slane %v496, 1
      %v498 = vmax.f32 %v496, %v497
      %v499 = vrot.slane %v456, 4
      %v500 = vmax.f32 %v456, %v499
      %v501 = vrot.slane %v500, 2
      %v502 = vmax.f32 %v500, %v501
      %v503 = vrot.slane %v502, 1
      %v504 = vmax.f32 %v502, %v503
      %vm513 = vcmask 1041409
      %v514 = vsel %vm513, %v468, %v462
      %vm515 = vcmask 1042434
      %v516 = vsel %vm515, %v474, %v514
      %vm517 = vcmask 1043459
      %v518 = vsel %vm517, %v480, %v516
      %vm519 = vcmask 1044484
      %v520 = vsel %vm519, %v486, %v518
      %vm521 = vcmask 1045509
      %v522 = vsel %vm521, %v492, %v520
      %vm523 = vcmask 1046534
      %v524 = vsel %vm523, %v498, %v522
      %vm525 = vcmask 1047559
      %v526 = vsel %vm525, %v504, %v524
      %528 = vst [vmem:[%s224] sm:$0xff] %v526
      %p529 = scmp.lt.s32.totalorder %s16, 2
      %s530 = scalar_select %p529, %s16, 2
      %s531 = smul.addr %s530, 8
      %s532 = scalar_lea.vmem %s5, %s531
      // Predicated region
      $region41: #{pointnet_set_abstraction.3} parent=39 // pred_check
        %p533 = pneg %p144
      $region42: #{pointnet_set_abstraction.3} parent=39 // pred_check_branch
        %535 = sbr.rel (%p533) target = $region44
      $region43: #{pointnet_set_abstraction.3} parent=39 // pred_region
        _
      $region44: #{pointnet_set_abstraction.3} parent=39 // pred_fallthru
        _
    $region40: #{pointnet_set_abstraction.3} parent=5 // pred_fallthru
      _
    %p536 = scmp.le.s32.totalorder 2, %s11
    // Predicated region
    $region45: #{pointnet_set_abstraction.3} parent=5 // pred_check
      %p537 = pneg %p536
    $region46: #{pointnet_set_abstraction.3} parent=5 // pred_check_branch
      %539 = sbr.rel (%p537) target = $region48
    $region47: #{pointnet_set_abstraction.3} parent=5 // pred_region
      %s540 = ssub.s32 %s11, 2
      // Predicated region
      $region49: #{pointnet_set_abstraction.3} parent=47 // pred_check
        %p541 = pneg %p150
      $region50: #{pointnet_set_abstraction.3} parent=47 // pred_check_branch
        %543 = sbr.rel (%p541) target = $region52
      $region51: #{pointnet_set_abstraction.3} parent=47 // pred_region
        %p544 = scmp.lt.s32.totalorder %s17, 2
        %s545 = scalar_select %p544, %s17, 2
        %s546 = smul.addr %s545, 8
        %s547 = scalar_lea.vmem %s5, %s546
      $region52: #{pointnet_set_abstraction.3} parent=47 // pred_fallthru
        _
    $region48: #{pointnet_set_abstraction.3} parent=5 // pred_fallthru
      _
  $region6: #{pointnet_set_abstraction.3} parent=0 // loop_footer
    %s15 = sadd.s32 1, %s11
  $region7: #{pointnet_set_abstraction.3} parent=0 // loop_footer_branch
    %10 = sbr.rel target = $region3
  $region8: #{pointnet_set_abstraction.3} parent=0 // loop_exit
    _

</llo_original>
